<compile_context>
chip_gen: v5e
topology: v5e:2x2
jax: 0.10.0
libtpu: 0.0.40
codegen_flags: <defaults>
</compile_context>

<pallas_src>
import functools

import jax
import jax.numpy as jnp
from jax.experimental import pallas as pl
from jax.experimental.pallas import tpu as pltpu

LN_EPS = 1e-5


def bert_output_kernel(h_ref, res_ref, w_ref, p_ref, o_ref):
    # h_ref:   (tm, I)  streamed intermediate-activation tile
    # res_ref: (tm, H)  streamed residual ("input_tensor") tile
    # w_ref:   (I, H)   dense weight, resident in VMEM across all grid steps
    # p_ref:   (3, H)   packed f32 params: row 0 = dense bias, 1 = LN gamma, 2 = LN beta
    # o_ref:   (tm, H)  output tile

    # Dense on the MXU: operands in native dtype (bf16 path is native), f32 accumulation.
    x = jnp.dot(h_ref[...], w_ref[...], preferred_element_type=jnp.float32)

    bias = p_ref[0:1, :]
    gamma = p_ref[1:2, :]
    beta = p_ref[2:3, :]

    # Dropout: eval-mode identity.
    # TODO(synk): training-mode dropout (pltpu.prng_random_bits mask) not implemented.

    # Bias + residual add in f32.
    x = x + bias + res_ref[...].astype(jnp.float32)

    # One-pass LayerNorm over the hidden dim: the two reductions (sum x, sum x*x) are
    # independent, var = E[x^2] - mean^2 (biased), eps = 1e-5, all in f32.
    mean = jnp.mean(x, axis=-1, keepdims=True)
    mean_sq = jnp.mean(x * x, axis=-1, keepdims=True)
    var = jnp.maximum(mean_sq - mean * mean, 0.0)
    out = (x - mean) * jax.lax.rsqrt(var + LN_EPS) * gamma + beta

    o_ref[...] = out.astype(o_ref.dtype)


def _round_up(x, m):
    return ((x + m - 1) // m) * m


def _vmem_cap_bytes():
    """Per-core scoped-VMEM budget: physical capacity minus compiler-scratch headroom."""
    try:
        cap = int(pltpu.get_tpu_info().vmem_capacity_bytes)
    except Exception:
        cap = 128 << 20  # conservative default (v5e/v6e)
    # v7x: 64 MiB -> ~52 MiB usable; v5e/v6e: 128 MiB -> 112 MiB usable.
    return cap - max(12 << 20, cap // 8)


def _vmem_bytes(tm, I, H, h_dtype, res_dtype, w_dtype, out_dtype, w_bufs):
    isz = lambda dt: jnp.dtype(dt).itemsize
    w_bytes = w_bufs * I * H * isz(w_dtype)          # resident weight (1 or 2 buffers)
    stream = 2 * (tm * I * isz(h_dtype)              # double-buffered streamed tiles
                  + tm * H * isz(res_dtype)
                  + tm * H * isz(out_dtype)
                  + 8 * H * 4)                       # packed params (sublane-padded)
    return int((w_bytes + stream) * 1.2) + (2 << 20)  # headroom for internal scratch


def _pick_row_tile(M, tm, row_align, fits):
    """Row tile: >=2 grid blocks when M allows (v7x megacore), minimal padding, VMEM fit."""
    n_blocks = max(pl.cdiv(M, tm), 2 if M >= 2 * row_align else 1)
    tm_eff = _round_up(pl.cdiv(M, n_blocks), row_align)
    while tm_eff > row_align and not fits(tm_eff):
        tm_eff = max(_round_up(tm_eff // 2, row_align), row_align)
    return tm_eff


@functools.partial(jax.jit,
                   static_argnames=("tm_eff", "single_buffer_weight", "vmem_limit"))
def _bert_output_call(hs, res, weight, params, *, tm_eff, single_buffer_weight,
                      vmem_limit):
    M, I = hs.shape
    H = res.shape[-1]
    n_blocks = pl.cdiv(M, tm_eff)
    M_pad = n_blocks * tm_eff
    if M_pad != M:
        # tm_eff is chosen so this pads at most a few sublanes, not a full tile.
        hs = jnp.pad(hs, ((0, M_pad - M), (0, 0)))
        res = jnp.pad(res, ((0, M_pad - M), (0, 0)))

    if single_buffer_weight:
        # Constant index_map => resident; a single buffer saves I*H*itemsize of VMEM.
        w_spec = pl.BlockSpec((I, H), lambda i: (0, 0), pipeline_mode=pl.Buffered(1))
        p_spec = pl.BlockSpec((3, H), lambda i: (0, 0), pipeline_mode=pl.Buffered(1))
    else:
        w_spec = pl.BlockSpec((I, H), lambda i: (0, 0))
        p_spec = pl.BlockSpec((3, H), lambda i: (0, 0))

    out = pl.pallas_call(
        bert_output_kernel,
        out_shape=jax.ShapeDtypeStruct((M_pad, H), hs.dtype),
        grid_spec=pltpu.PrefetchScalarGridSpec(
            num_scalar_prefetch=0,
            grid=(n_blocks,),
            in_specs=[
                # NOTE: set pipeline_mode=pl.Buffered(3) here only if profiling (v7x)
                # shows the (tm, I) hidden_states DMA exposed.
                pl.BlockSpec((tm_eff, I), lambda i: (i, 0)),   # hidden_states rows
                pl.BlockSpec((tm_eff, H), lambda i: (i, 0)),   # residual rows
                w_spec,                                        # dense weight (resident)
                p_spec,                                        # packed bias/gamma/beta
            ],
            out_specs=pl.BlockSpec((tm_eff, H), lambda i: (i, 0)),
        ),
        compiler_params=pltpu.CompilerParams(
            dimension_semantics=("parallel",),
            vmem_limit_bytes=vmem_limit,
        ),
    )(hs, res, weight, params)

    if M_pad != M:
        out = out[:M]
    return out


_SINGLE_BUFFER_WEIGHT_OK = None  # capability cache for pipeline_mode=pl.Buffered(1)


def bert_output(hidden_states, input_tensor, weight, bias, gamma, beta, *, tm=512):
    """hidden_states: [M, I]; input_tensor: [M, H]; weight: [I, H]; bias/gamma/beta: [H]."""
    global _SINGLE_BUFFER_WEIGHT_OK
    M, I = hidden_states.shape
    H = input_tensor.shape[-1]

    # Packed LN/bias params, kept in f32 regardless of activation dtype.
    params = jnp.stack([bias, gamma, beta], axis=0).astype(jnp.float32)  # (3, H)

    # Row alignment: 8 sublanes * dtype packing (f32 -> 8 rows, bf16 -> 16 rows).
    min_isz = min(jnp.dtype(hidden_states.dtype).itemsize,
                  jnp.dtype(input_tensor.dtype).itemsize)
    row_align = 8 * max(4 // max(min_isz, 1), 1)

    cap = _vmem_cap_bytes()
    est = lambda t: _vmem_bytes(t, I, H, hidden_states.dtype, input_tensor.dtype,
                                weight.dtype, hidden_states.dtype, w_bufs=2)
    tm_eff = _pick_row_tile(M, tm, row_align, fits=lambda t: est(t) <= cap)
    if est(tm_eff) > cap:
        # TODO(synk): K-tiled fallback (grid over intermediate_size with an f32 VMEM
        # accumulator) for configs whose resident weight alone overflows v7x VMEM.
        raise ValueError(
            f"BertOutput tiling does not fit VMEM (need ~{est(tm_eff) >> 20} MiB, "
            f"budget {cap >> 20} MiB); add a K-tiled schedule or use bf16 weights.")
    vmem_limit = max(min(est(tm_eff), cap), 32 << 20)

    modes = ([True, False] if _SINGLE_BUFFER_WEIGHT_OK is None
             else [_SINGLE_BUFFER_WEIGHT_OK])
    last_err = None
    for sb in modes:
        try:
            out = _bert_output_call(hidden_states, input_tensor, weight, params,
                                    tm_eff=tm_eff, single_buffer_weight=sb,
                                    vmem_limit=vmem_limit)
            _SINGLE_BUFFER_WEIGHT_OK = sb
            return out
        except Exception as e:  # Buffered(1) unsupported -> fall back to default specs.
            last_err = e
    raise last_err


def reference(hidden_states, input_tensor, weight, bias, gamma, beta):
    x = hidden_states.astype(jnp.float32) @ weight.astype(jnp.float32) + bias
    x = x + input_tensor.astype(jnp.float32)
    mean = jnp.mean(x, axis=-1, keepdims=True)
    var = jnp.mean((x - mean) ** 2, axis=-1, keepdims=True)
    return (x - mean) / jnp.sqrt(var + LN_EPS) * gamma + beta


if __name__ == "__main__":
    # Small, lane-dense config: batch=2, seq=8, hidden_size=128, intermediate_size=256.
    B, S, H, I = 2, 8, 128, 256
    key = jax.random.PRNGKey(0)
    k1, k2, k3, k4 = jax.random.split(key, 4)

    hidden_states = jax.random.normal(k1, (B, S, I), dtype=jnp.float32)
    input_tensor = jax.random.normal(k2, (B, S, H), dtype=jnp.float32)

    # Deterministic parameter init (Linear: in=I -> out=H; LayerNorm affine on H).
    weight = jax.random.normal(k3, (I, H), dtype=jnp.float32) * 0.02   # [in, out]
    bias = jax.random.normal(k4, (H,), dtype=jnp.float32) * 0.02
    gamma = jnp.ones((H,), dtype=jnp.float32)
    beta = jnp.zeros((H,), dtype=jnp.float32)

    hs_flat = hidden_states.reshape(B * S, I)
    res_flat = input_tensor.reshape(B * S, H)

    # f32 run + correctness check.
    out = jax.block_until_ready(
        bert_output(hs_flat, res_flat, weight, bias, gamma, beta))
    ref = reference(hs_flat, res_flat, weight, bias, gamma, beta)
    assert out.shape == (B * S, H)
    assert jnp.allclose(out, ref, atol=1e-3, rtol=1e-3), "f32 mismatch vs reference"
    assert out.reshape(B, S, H).shape == (B, S, H)

    # bf16 smoke run: operands go to the MXU natively in bf16 with f32 accumulation
    # (recommended path on v5e when model numerics allow).
    out_bf16 = jax.block_until_ready(
        bert_output(hs_flat.astype(jnp.bfloat16), res_flat.astype(jnp.bfloat16),
                    weight.astype(jnp.bfloat16), bias, gamma, beta))
    assert jnp.allclose(out_bf16.astype(jnp.float32), ref, atol=5e-2, rtol=5e-2), \
        "bf16 mismatch vs reference"

    print("KERNEL_OK")
</pallas_src>

<mosaic_0001>
module attributes {stable_mosaic.version = 11 : i64} {
  func.func @bert_output_kernel(%arg0: i32, %arg1: memref<8x256xf32, #tpu.memory_space<vmem>>, %arg2: memref<8x128xf32, #tpu.memory_space<vmem>>, %arg3: memref<256x128xf32, #tpu.memory_space<vmem>>, %arg4: memref<3x128xf32, #tpu.memory_space<vmem>>, %arg5: memref<8x128xf32, #tpu.memory_space<vmem>>) attributes {dimension_semantics = [#tpu.dimension_semantics<parallel>], iteration_bounds = array<i64: 2>, scalar_prefetch = 0 : i64, scratch_operands = 0 : i64, tpu.core_type = #tpu.core_type<tc>, window_params = [{transform_indices = @transform_0, window_bounds = array<i64: 8, 256>}, {transform_indices = @transform_1, window_bounds = array<i64: 8, 128>}, {pipeline_mode = #tpu.pipeline_mode<synchronous>, transform_indices = @transform_2, window_bounds = array<i64: 256, 128>}, {pipeline_mode = #tpu.pipeline_mode<synchronous>, transform_indices = @transform_3, window_bounds = array<i64: 3, 128>}, {transform_indices = @transform_4, window_bounds = array<i64: 8, 128>}]} {
    %c0 = arith.constant 0 : index
    %c0_0 = arith.constant 0 : index
    %0 = vector.load %arg1[%c0, %c0_0] : memref<8x256xf32, #tpu.memory_space<vmem>>, vector<8x256xf32>
    %c0_1 = arith.constant 0 : index
    %c0_2 = arith.constant 0 : index
    %1 = vector.load %arg3[%c0_1, %c0_2] : memref<256x128xf32, #tpu.memory_space<vmem>>, vector<256x128xf32>
    %cst = arith.constant dense<0.000000e+00> : vector<8x128xf32>
    %2 = tpu.matmul %0, %1, %cst {dimension_numbers = #tpu.dot_dimension_numbers<[1], [0], [0], [1], [0, 0, 1, 1], [], []>} : vector<8x256xf32>, vector<256x128xf32>, vector<8x128xf32> -> vector<8x128xf32>
    %c0_3 = arith.constant 0 : index
    %c0_4 = arith.constant 0 : index
    %3 = vector.load %arg4[%c0_3, %c0_4] : memref<3x128xf32, #tpu.memory_space<vmem>>, vector<1x128xf32>
    %c1 = arith.constant 1 : index
    %c0_5 = arith.constant 0 : index
    %4 = vector.load %arg4[%c1, %c0_5] : memref<3x128xf32, #tpu.memory_space<vmem>>, vector<1x128xf32>
    %c2 = arith.constant 2 : index
    %c0_6 = arith.constant 0 : index
    %5 = vector.load %arg4[%c2, %c0_6] : memref<3x128xf32, #tpu.memory_space<vmem>>, vector<1x128xf32>
    %6 = vector.broadcast %3 : vector<1x128xf32> to vector<8x128xf32>
    %7 = arith.addf %2, %6 : vector<8x128xf32>
    %c0_7 = arith.constant 0 : index
    %c0_8 = arith.constant 0 : index
    %8 = vector.load %arg2[%c0_7, %c0_8] : memref<8x128xf32, #tpu.memory_space<vmem>>, vector<8x128xf32>
    %9 = arith.addf %7, %8 : vector<8x128xf32>
    %cst_9 = arith.constant dense<0.000000e+00> : vector<8xf32>
    %10 = vector.multi_reduction <add>, %9, %cst_9 [1] : vector<8x128xf32> to vector<8xf32>
    %11 = vector.shape_cast %10 : vector<8xf32> to vector<8x1xf32>
    %cst_10 = arith.constant 1.280000e+02 : f32
    %12 = vector.broadcast %cst_10 : f32 to vector<8x1xf32>
    %13 = arith.divf %11, %12 : vector<8x1xf32>
    %14 = arith.mulf %9, %9 : vector<8x128xf32>
    %cst_11 = arith.constant dense<0.000000e+00> : vector<8xf32>
    %15 = vector.multi_reduction <add>, %14, %cst_11 [1] : vector<8x128xf32> to vector<8xf32>
    %16 = vector.shape_cast %15 : vector<8xf32> to vector<8x1xf32>
    %cst_12 = arith.constant 1.280000e+02 : f32
    %17 = vector.broadcast %cst_12 : f32 to vector<8x1xf32>
    %18 = arith.divf %16, %17 : vector<8x1xf32>
    %19 = arith.mulf %13, %13 : vector<8x1xf32>
    %20 = arith.subf %18, %19 : vector<8x1xf32>
    %cst_13 = arith.constant 0.000000e+00 : f32
    %21 = vector.broadcast %cst_13 : f32 to vector<8x1xf32>
    %22 = arith.maximumf %20, %21 : vector<8x1xf32>
    %23 = vector.broadcast %13 : vector<8x1xf32> to vector<8x128xf32>
    %24 = arith.subf %9, %23 : vector<8x128xf32>
    %cst_14 = arith.constant 9.99999974E-6 : f32
    %25 = vector.broadcast %cst_14 : f32 to vector<8x1xf32>
    %26 = arith.addf %22, %25 : vector<8x1xf32>
    %27 = math.rsqrt %26 : vector<8x1xf32>
    %28 = vector.broadcast %27 : vector<8x1xf32> to vector<8x128xf32>
    %29 = arith.mulf %24, %28 : vector<8x128xf32>
    %30 = vector.broadcast %4 : vector<1x128xf32> to vector<8x128xf32>
    %31 = arith.mulf %29, %30 : vector<8x128xf32>
    %32 = vector.broadcast %5 : vector<1x128xf32> to vector<8x128xf32>
    %33 = arith.addf %31, %32 : vector<8x128xf32>
    %c0_15 = arith.constant 0 : index
    %c0_16 = arith.constant 0 : index
    %34 = vector.load %arg5[%c0_15, %c0_16] : memref<8x128xf32, #tpu.memory_space<vmem>>, vector<8x128xf32>
    tpu.vector_store %arg5[%c0_15, %c0_16], %33 {strides = array<i32>} : memref<8x128xf32, #tpu.memory_space<vmem>>, vector<8x128xf32>,
    return
  }
  func.func @transform_0(%arg0: i32) -> (i32, i32) {
    %c0_i32 = arith.constant 0 : i32
    %c0_i32_0 = arith.constant 0 : i32
    return %arg0, %c0_i32 : i32, i32
  }
  func.func @transform_1(%arg0: i32) -> (i32, i32) {
    %c0_i32 = arith.constant 0 : i32
    %c0_i32_0 = arith.constant 0 : i32
    return %arg0, %c0_i32 : i32, i32
  }
  func.func @transform_2(%arg0: i32) -> (i32, i32) {
    %c0_i32 = arith.constant 0 : i32
    %c0_i32_0 = arith.constant 0 : i32
    %c0_i32_1 = arith.constant 0 : i32
    return %c0_i32, %c0_i32_0 : i32, i32
  }
  func.func @transform_3(%arg0: i32) -> (i32, i32) {
    %c0_i32 = arith.constant 0 : i32
    %c0_i32_0 = arith.constant 0 : i32
    %c0_i32_1 = arith.constant 0 : i32
    return %c0_i32, %c0_i32_0 : i32, i32
  }
  func.func @transform_4(%arg0: i32) -> (i32, i32) {
    %c0_i32 = arith.constant 0 : i32
    %c0_i32_0 = arith.constant 0 : i32
    return %arg0, %c0_i32 : i32, i32
  }
}

module attributes {stable_mosaic.version = 11 : i64} {
  func.func @bert_output_kernel(%arg0: i32, %arg1: memref<8x256xf32, #tpu.memory_space<vmem>>, %arg2: memref<8x128xf32, #tpu.memory_space<vmem>>, %arg3: memref<256x128xf32, #tpu.memory_space<vmem>>, %arg4: memref<3x128xf32, #tpu.memory_space<vmem>>, %arg5: memref<8x128xf32, #tpu.memory_space<vmem>>) attributes {dimension_semantics = [#tpu.dimension_semantics<parallel>], iteration_bounds = array<i64: 2>, scalar_prefetch = 0 : i64, scratch_operands = 0 : i64, tpu.core_type = #tpu.core_type<tc>, window_params = [{transform_indices = @transform_0, window_bounds = array<i64: 8, 256>}, {transform_indices = @transform_1, window_bounds = array<i64: 8, 128>}, {pipeline_mode = #tpu.pipeline_mode<synchronous>, transform_indices = @transform_2, window_bounds = array<i64: 256, 128>}, {pipeline_mode = #tpu.pipeline_mode<synchronous>, transform_indices = @transform_3, window_bounds = array<i64: 3, 128>}, {transform_indices = @transform_4, window_bounds = array<i64: 8, 128>}]} {
    %c0 = arith.constant 0 : index
    %c0_0 = arith.constant 0 : index
    %0 = vector.load %arg1[%c0, %c0_0] : memref<8x256xf32, #tpu.memory_space<vmem>>, vector<8x256xf32>
    %c0_1 = arith.constant 0 : index
    %c0_2 = arith.constant 0 : index
    %1 = vector.load %arg3[%c0_1, %c0_2] : memref<256x128xf32, #tpu.memory_space<vmem>>, vector<256x128xf32>
    %cst = arith.constant dense<0.000000e+00> : vector<8x128xf32>
    %2 = tpu.matmul %0, %1, %cst {dimension_numbers = #tpu.dot_dimension_numbers<[1], [0], [0], [1], [0, 0, 1, 1], [], []>} : vector<8x256xf32>, vector<256x128xf32>, vector<8x128xf32> -> vector<8x128xf32>
    %c0_3 = arith.constant 0 : index
    %c0_4 = arith.constant 0 : index
    %3 = vector.load %arg4[%c0_3, %c0_4] : memref<3x128xf32, #tpu.memory_space<vmem>>, vector<1x128xf32>
    %c1 = arith.constant 1 : index
    %c0_5 = arith.constant 0 : index
    %4 = vector.load %arg4[%c1, %c0_5] : memref<3x128xf32, #tpu.memory_space<vmem>>, vector<1x128xf32>
    %c2 = arith.constant 2 : index
    %c0_6 = arith.constant 0 : index
    %5 = vector.load %arg4[%c2, %c0_6] : memref<3x128xf32, #tpu.memory_space<vmem>>, vector<1x128xf32>
    %6 = vector.broadcast %3 : vector<1x128xf32> to vector<8x128xf32>
    %7 = arith.addf %2, %6 : vector<8x128xf32>
    %c0_7 = arith.constant 0 : index
    %c0_8 = arith.constant 0 : index
    %8 = vector.load %arg2[%c0_7, %c0_8] : memref<8x128xf32, #tpu.memory_space<vmem>>, vector<8x128xf32>
    %9 = arith.addf %7, %8 : vector<8x128xf32>
    %cst_9 = arith.constant dense<0.000000e+00> : vector<8xf32>
    %10 = vector.multi_reduction <add>, %9, %cst_9 [1] : vector<8x128xf32> to vector<8xf32>
    %11 = vector.shape_cast %10 : vector<8xf32> to vector<8x1xf32>
    %cst_10 = arith.constant 1.280000e+02 : f32
    %12 = vector.broadcast %cst_10 : f32 to vector<8x1xf32>
    %13 = arith.divf %11, %12 : vector<8x1xf32>
    %14 = arith.mulf %9, %9 : vector<8x128xf32>
    %cst_11 = arith.constant dense<0.000000e+00> : vector<8xf32>
    %15 = vector.multi_reduction <add>, %14, %cst_11 [1] : vector<8x128xf32> to vector<8xf32>
    %16 = vector.shape_cast %15 : vector<8xf32> to vector<8x1xf32>
    %cst_12 = arith.constant 1.280000e+02 : f32
    %17 = vector.broadcast %cst_12 : f32 to vector<8x1xf32>
    %18 = arith.divf %16, %17 : vector<8x1xf32>
    %19 = arith.mulf %13, %13 : vector<8x1xf32>
    %20 = arith.subf %18, %19 : vector<8x1xf32>
    %cst_13 = arith.constant 0.000000e+00 : f32
    %21 = vector.broadcast %cst_13 : f32 to vector<8x1xf32>
    %22 = arith.maximumf %20, %21 : vector<8x1xf32>
    %23 = vector.broadcast %13 : vector<8x1xf32> to vector<8x128xf32>
    %24 = arith.subf %9, %23 : vector<8x128xf32>
    %cst_14 = arith.constant 9.99999974E-6 : f32
    %25 = vector.broadcast %cst_14 : f32 to vector<8x1xf32>
    %26 = arith.addf %22, %25 : vector<8x1xf32>
    %27 = math.rsqrt %26 : vector<8x1xf32>
    %28 = vector.broadcast %27 : vector<8x1xf32> to vector<8x128xf32>
    %29 = arith.mulf %24, %28 : vector<8x128xf32>
    %30 = vector.broadcast %4 : vector<1x128xf32> to vector<8x128xf32>
    %31 = arith.mulf %29, %30 : vector<8x128xf32>
    %32 = vector.broadcast %5 : vector<1x128xf32> to vector<8x128xf32>
    %33 = arith.addf %31, %32 : vector<8x128xf32>
    %c0_15 = arith.constant 0 : index
    %c0_16 = arith.constant 0 : index
    %34 = vector.load %arg5[%c0_15, %c0_16] : memref<8x128xf32, #tpu.memory_space<vmem>>, vector<8x128xf32>
    tpu.vector_store %arg5[%c0_15, %c0_16], %33 {strides = array<i32>} : memref<8x128xf32, #tpu.memory_space<vmem>>, vector<8x128xf32>,
    return
  }
  func.func @transform_0(%arg0: i32) -> (i32, i32) {
    %c0_i32 = arith.constant 0 : i32
    %c0_i32_0 = arith.constant 0 : i32
    return %arg0, %c0_i32 : i32, i32
  }
  func.func @transform_1(%arg0: i32) -> (i32, i32) {
    %c0_i32 = arith.constant 0 : i32
    %c0_i32_0 = arith.constant 0 : i32
    return %arg0, %c0_i32 : i32, i32
  }
  func.func @transform_2(%arg0: i32) -> (i32, i32) {
    %c0_i32 = arith.constant 0 : i32
    %c0_i32_0 = arith.constant 0 : i32
    %c0_i32_1 = arith.constant 0 : i32
    return %c0_i32, %c0_i32_0 : i32, i32
  }
  func.func @transform_3(%arg0: i32) -> (i32, i32) {
    %c0_i32 = arith.constant 0 : i32
    %c0_i32_0 = arith.constant 0 : i32
    %c0_i32_1 = arith.constant 0 : i32
    return %c0_i32, %c0_i32_0 : i32, i32
  }
  func.func @transform_4(%arg0: i32) -> (i32, i32) {
    %c0_i32 = arith.constant 0 : i32
    %c0_i32_0 = arith.constant 0 : i32
    return %arg0, %c0_i32 : i32, i32
  }
}

</mosaic_0001>

<llo_original>
// kernel: _bert_output_call.1
$region0: #{_bert_output_call.1}
  #allocation0 [shape = 'u32[]', space=smem, size = 0x4, offset = 0x4, fixed_abs, tag = 'smem constant byte address 0x4 - core index']
  #allocation1 [shape = 'u32[72,128]{1,0:T(1,128)}', space=vmem, size = 0x9000, scoped, tag = 'internal scratch']
  %s0 = inlined_call_operand.hbm [shape: f32[16,256], index: 0, kind: input, shape index: {}]
  %s1 = inlined_call_operand.hbm [shape: f32[16,128], index: 1, kind: input, shape index: {}]
  %s2 = inlined_call_operand.hbm [shape: f32[256,128], index: 2, kind: input, shape index: {}]
  %s3 = inlined_call_operand.hbm [shape: f32[3,128], index: 3, kind: input, shape index: {}]
  %s4 = inlined_call_operand.hbm [shape: f32[16,128], index: 4, kind: output, shape index: {}]
  %s5 = sld [smem:[#allocation0]]
  $region65: #{_bert_output_call.1} parent=0
    _
  %s7 = ssub.s32 1, %s5
  %s8 = scalar_select 0, %s7, %s5
  $region1: #{_bert_output_call.1} parent=0
    #allocation2 [shape = 'u8[16384]{0}', space=vmem, size = 0x4000, scoped, tag = 'input window, operand 0']
    #allocation3 [shape = 's32[2]{0}', space=sflag, size = 0x8, scoped, tag = 'scoped memory for _bert_output_call.1']
    #allocation4 [shape = 's32[2]{0}', space=sflag, size = 0x8, scoped, tag = 'scoped memory for _bert_output_call.1']
    #allocation5 [shape = 'u8[8192]{0}', space=vmem, size = 0x2000, scoped, tag = 'input window, operand 1']
    #allocation6 [shape = 's32[2]{0}', space=sflag, size = 0x8, scoped, tag = 'scoped memory for _bert_output_call.1']
    #allocation7 [shape = 'u8[131072]{0}', space=vmem, size = 0x20000, scoped, tag = 'input window, operand 2, single buffered']
    #allocation8 [shape = 'u8[2048]{0}', space=vmem, size = 0x800, scoped, tag = 'input window, operand 3, single buffered']
    #allocation9 [shape = 's32[1]{0}', space=sflag, size = 0x4, scoped, tag = 'scoped memory for _bert_output_call.1']
    #allocation10 [shape = 'u8[8192]{0}', space=vmem, size = 0x2000, scoped, tag = 'output window, operand 0']
    %9 = vsyncpa [#allocation3], 0
    %s10 = scalar_lea.sflag [#allocation3], 1
    %11 = vsyncpa %s10, 0
    %12 = vsyncpa [#allocation6], 0
    %s13 = scalar_lea.sflag [#allocation6], 1
    %14 = vsyncpa %s13, 0
    %15 = vsyncpa [#allocation9], 0
    %16 = vsyncpa [#allocation4], 0
    %s17 = scalar_lea.sflag [#allocation4], 1
    %18 = vsyncpa %s17, 0
    loop: start=0, step=1, limit=4
    $region2: #{_bert_output_call.1} parent=1 // loop_pre_header
      _
    $region3: #{_bert_output_call.1} parent=1 // loop_header
      %s20 = sphi 0, %s24
      %p21 = scmp.ge.s32.totalorder %s20, 4
      %s30 = sphi 0, %s32
      %s33 = sphi 0, %s30
      %s34 = sphi 0, %s33
      %s50 = sphi 0, %s34
      %s56 = sphi 0, %s58
      %s59 = sphi 0, %s56
      %s60 = sphi 0, %s59
      %s76 = sphi 0, %s60
      %s80 = sphi 0, %s80
      %s82 = sphi 0, %s80
      %s83 = sphi 0, %s82
      %s97 = sphi 0, %s83
      %s101 = sphi 0, %s101
      %s103 = sphi 0, %s101
      %s104 = sphi 0, %s103
      %s118 = sphi 0, %s104
      %s124 = sphi 0, %s126
      %s127 = sphi 0, %s124
      %s128 = sphi 0, %s127
      %s144 = sphi 0, %s128
    $region4: #{_bert_output_call.1} parent=1 // loop_header_branch
      %23 = sbr.rel (%p21) target = $region8
    $region5: #{_bert_output_call.1} parent=1 // loop_body
      %s25 = ssub.s32 %s20, 1
      %s26 = ssub.s32 %s20, 2
      %s27 = sadd.s32 %s20, 1
      %s28 = ssub.s32 %s20, %s27
      %p29 = scmp.eq.s32.totalorder %s28, 0
      %s31 = sadd.s32 %s30, 1
      %s32 = scalar_select %p29, %s30, %s31
      %p35 = pneg %p29
      %p36 = scmp.eq.s32.totalorder %s20, 1
      %p37 = por %p35, %p36
      %p38 = scmp.ne.s32.totalorder %s30, %s33
      %p39 = scmp.eq.s32.totalorder %s20, 0
      %p40 = por %p38, %p39
      %p41 = scmp.ne.s32.totalorder %s30, %s33
      %p42 = scmp.eq.s32.totalorder %s25, 1
      %p43 = por %p41, %p42
      %p44 = scmp.ne.s32.totalorder %s33, %s34
      %p45 = scmp.eq.s32.totalorder %s25, 0
      %p46 = por %p44, %p45
      %p47 = scmp.ne.s32.totalorder %s33, %s34
      %p48 = scmp.eq.s32.totalorder %s26, 1
      %p49 = por %p47, %p48
      %p51 = scmp.ne.s32.totalorder %s34, %s50
      %p52 = scmp.eq.s32.totalorder %s26, 0
      %p53 = por %p51, %p52
      %s54 = ssub.s32 %s20, %s27
      %p55 = scmp.eq.s32.totalorder %s54, 0
      %s57 = sadd.s32 %s56, 1
      %s58 = scalar_select %p55, %s56, %s57
      %p61 = pneg %p55
      %p62 = scmp.eq.s32.totalorder %s20, 1
      %p63 = por %p61, %p62
      %p64 = scmp.ne.s32.totalorder %s56, %s59
      %p65 = scmp.eq.s32.totalorder %s20, 0
      %p66 = por %p64, %p65
      %p67 = scmp.ne.s32.totalorder %s56, %s59
      %p68 = scmp.eq.s32.totalorder %s25, 1
      %p69 = por %p67, %p68
      %p70 = scmp.ne.s32.totalorder %s59, %s60
      %p71 = scmp.eq.s32.totalorder %s25, 0
      %p72 = por %p70, %p71
      %p73 = scmp.ne.s32.totalorder %s59, %s60
      %p74 = scmp.eq.s32.totalorder %s26, 1
      %p75 = por %p73, %p74
      %p77 = scmp.ne.s32.totalorder %s60, %s76
      %p78 = scmp.eq.s32.totalorder %s26, 0
      %p79 = por %p77, %p78
      %s81 = sadd.s32 %s80, 1
      %p84 = scmp.eq.s32.totalorder %s20, 1
      %p85 = scmp.ne.s32.totalorder %s80, %s82
      %p86 = scmp.eq.s32.totalorder %s20, 0
      %p87 = por %p85, %p86
      %p88 = scmp.ne.s32.totalorder %s80, %s82
      %p89 = scmp.eq.s32.totalorder %s25, 1
      %p90 = por %p88, %p89
      %p91 = scmp.ne.s32.totalorder %s82, %s83
      %p92 = scmp.eq.s32.totalorder %s25, 0
      %p93 = por %p91, %p92
      %p94 = scmp.ne.s32.totalorder %s82, %s83
      %p95 = scmp.eq.s32.totalorder %s26, 1
      %p96 = por %p94, %p95
      %p98 = scmp.ne.s32.totalorder %s83, %s97
      %p99 = scmp.eq.s32.totalorder %s26, 0
      %p100 = por %p98, %p99
      %s102 = sadd.s32 %s101, 1
      %p105 = scmp.eq.s32.totalorder %s20, 1
      %p106 = scmp.ne.s32.totalorder %s101, %s103
      %p107 = scmp.eq.s32.totalorder %s20, 0
      %p108 = por %p106, %p107
      %p109 = scmp.ne.s32.totalorder %s101, %s103
      %p110 = scmp.eq.s32.totalorder %s25, 1
      %p111 = por %p109, %p110
      %p112 = scmp.ne.s32.totalorder %s103, %s104
      %p113 = scmp.eq.s32.totalorder %s25, 0
      %p114 = por %p112, %p113
      %p115 = scmp.ne.s32.totalorder %s103, %s104
      %p116 = scmp.eq.s32.totalorder %s26, 1
      %p117 = por %p115, %p116
      %p119 = scmp.ne.s32.totalorder %s104, %s118
      %p120 = scmp.eq.s32.totalorder %s26, 0
      %p121 = por %p119, %p120
      %s122 = ssub.s32 %s20, %s27
      %p123 = scmp.eq.s32.totalorder %s122, 0
      %s125 = sadd.s32 %s124, 1
      %s126 = scalar_select %p123, %s124, %s125
      %p129 = pneg %p123
      %p130 = scmp.eq.s32.totalorder %s20, 1
      %p131 = por %p129, %p130
      %p132 = scmp.ne.s32.totalorder %s124, %s127
      %p133 = scmp.eq.s32.totalorder %s20, 0
      %p134 = por %p132, %p133
      %p135 = scmp.ne.s32.totalorder %s124, %s127
      %p136 = scmp.eq.s32.totalorder %s25, 1
      %p137 = por %p135, %p136
      %p138 = scmp.ne.s32.totalorder %s127, %s128
      %p139 = scmp.eq.s32.totalorder %s25, 0
      %p140 = por %p138, %p139
      %p141 = scmp.ne.s32.totalorder %s127, %s128
      %p142 = scmp.eq.s32.totalorder %s26, 1
      %p143 = por %p141, %p142
      %p145 = scmp.ne.s32.totalorder %s128, %s144
      %p146 = scmp.eq.s32.totalorder %s26, 0
      %p147 = por %p145, %p146
      %p148 = scmp.le.s32.totalorder 1, %s20
      %p149 = scmp.lt.s32.totalorder %s20, 3
      %p150 = pnand %p148, %p149
      %p151 = pneg %p150
      // Predicated region
      $region9: #{_bert_output_call.1} parent=5 // pred_check
        _
      $region10: #{_bert_output_call.1} parent=5 // pred_check_branch
        %153 = sbr.rel (%p150) target = $region12
      $region11: #{_bert_output_call.1} parent=5 // pred_region
        %s154 = ssub.s32 %s20, 1
        // Predicated region
        $region13: #{_bert_output_call.1} parent=11 // pred_check
          %p155 = pneg %p93
        $region14: #{_bert_output_call.1} parent=11 // pred_check_branch
          %157 = sbr.rel (%p155) target = $region16
        $region15: #{_bert_output_call.1} parent=11 // pred_region
          %159 = vsyncadd [#allocation6], 0
          %s160 = sshll.u32 %s2, 4
          %s161 = int_to_ptr.hbm [resolvable:$true] %s160
          %s162 = sshll.u32 [#allocation7], 4
          %s163 = int_to_ptr.vmem [resolvable:$true] %s162
          %168 = dma.hbm_to_vmem [thread:$0]  %s161, 4096, %s163, [#allocation6], 128, 128, 8
        $region16: #{_bert_output_call.1} parent=11 // pred_fallthru
          _
        // Predicated region
        $region17: #{_bert_output_call.1} parent=11 // pred_check
          %p169 = pneg %p114
        $region18: #{_bert_output_call.1} parent=11 // pred_check_branch
          %171 = sbr.rel (%p169) target = $region20
        $region19: #{_bert_output_call.1} parent=11 // pred_region
          %173 = vsyncadd [#allocation9], 0
          %s175 = sshll.u32 %s3, 4
          %s176 = int_to_ptr.hbm [resolvable:$true] %s175
          %s177 = sshll.u32 [#allocation8], 4
          %s178 = int_to_ptr.vmem [resolvable:$true] %s177
          %180 = dma.hbm_to_vmem [thread:$0]  %s176, 64, %s178, [#allocation9]
        $region20: #{_bert_output_call.1} parent=11 // pred_fallthru
          _
      $region12: #{_bert_output_call.1} parent=5 // pred_fallthru
        _
      %p181 = scmp.lt.s32.totalorder %s20, 2
      // Predicated region
      $region21: #{_bert_output_call.1} parent=5 // pred_check
        %p182 = pneg %p181
      $region22: #{_bert_output_call.1} parent=5 // pred_check_branch
        %184 = sbr.rel (%p182) target = $region24
      $region23: #{_bert_output_call.1} parent=5 // pred_region
        // Predicated region
        $region25: #{_bert_output_call.1} parent=23 // pred_check
          %p185 = pneg %p40
        $region26: #{_bert_output_call.1} parent=23 // pred_check_branch
          %187 = sbr.rel (%p185) target = $region28
        $region27: #{_bert_output_call.1} parent=23 // pred_region
          %s188 = sand.u32 %s30, 1
          %s189 = scalar_lea.sflag [#allocation3], %s188
          %s190 = sand.u32 %s30, 1
          %s191 = smul.addr %s190, 16
          %s192 = scalar_lea.vmem [#allocation2], %s191
          %194 = vsyncadd %s189, 0
          %s195 = smul.addr %s20, 2
          %s196 = smul.addr %s195, 8
          %s197 = scalar_lea.hbm %s0, %s196
          %s199 = sshll.u32 %s197, 4
          %s200 = int_to_ptr.hbm [resolvable:$true] %s199
          %s201 = sshll.u32 %s192, 4
          %s202 = int_to_ptr.vmem [resolvable:$true] %s201
          %204 = dma.hbm_to_vmem [thread:$0]  %s200, 256, %s202, %s189
        $region28: #{_bert_output_call.1} parent=23 // pred_fallthru
          _
        // Predicated region
        $region29: #{_bert_output_call.1} parent=23 // pred_check
          %p205 = pneg %p66
        $region30: #{_bert_output_call.1} parent=23 // pred_check_branch
          %207 = sbr.rel (%p205) target = $region32
        $region31: #{_bert_output_call.1} parent=23 // pred_region
          %s208 = sand.u32 %s20, 1
          %s209 = scalar_lea.sflag [#allocation6], %s208
          %s210 = sand.u32 %s56, 1
          %s211 = smul.addr %s210, 8
          %s212 = scalar_lea.vmem [#allocation5], %s211
          %214 = vsyncadd %s209, 0
          %s215 = smul.addr %s20, 8
          %s216 = scalar_lea.hbm %s1, %s215
          %s218 = sshll.u32 %s216, 4
          %s219 = int_to_ptr.hbm [resolvable:$true] %s218
          %s220 = sshll.u32 %s212, 4
          %s221 = int_to_ptr.vmem [resolvable:$true] %s220
          %223 = dma.hbm_to_vmem [thread:$0]  %s219, 128, %s221, %s209
        $region32: #{_bert_output_call.1} parent=23 // pred_fallthru
          _
      $region24: #{_bert_output_call.1} parent=5 // pred_fallthru
        _
      %p224 = scmp.le.s32.totalorder 1, %s20
      %p225 = scmp.lt.s32.totalorder %s20, 3
      %p226 = pnand %p224, %p225
      %p227 = pneg %p226
      // Predicated region
      $region33: #{_bert_output_call.1} parent=5 // pred_check
        _
      $region34: #{_bert_output_call.1} parent=5 // pred_check_branch
        %229 = sbr.rel (%p226) target = $region36
      $region35: #{_bert_output_call.1} parent=5 // pred_region
        %s230 = ssub.s32 %s20, 1
        %s231 = sand.u32 %s33, 1
        %s232 = scalar_lea.sflag [#allocation3], %s231
        %s233 = sand.u32 %s33, 1
        %s234 = smul.addr %s233, 16
        %s235 = scalar_lea.vmem [#allocation2], %s234
        // Predicated region
        $region37: #{_bert_output_call.1} parent=35 // pred_check
          %p236 = pneg %p46
        $region38: #{_bert_output_call.1} parent=35 // pred_check_branch
          %238 = sbr.rel (%p236) target = $region40
        $region39: #{_bert_output_call.1} parent=35 // pred_region
          %240 = dma.done %s232, 256
        $region40: #{_bert_output_call.1} parent=35 // pred_fallthru
          _
        %s241 = sand.u32 %s25, 1
        %s242 = scalar_lea.sflag [#allocation6], %s241
        %s243 = sand.u32 %s59, 1
        %s244 = smul.addr %s243, 8
        %s245 = scalar_lea.vmem [#allocation5], %s244
        // Predicated region
        $region41: #{_bert_output_call.1} parent=35 // pred_check
          %p246 = pneg %p72
        $region42: #{_bert_output_call.1} parent=35 // pred_check_branch
          %248 = sbr.rel (%p246) target = $region44
        $region43: #{_bert_output_call.1} parent=35 // pred_region
          %250 = dma.done %s242, 128
        $region44: #{_bert_output_call.1} parent=35 // pred_fallthru
          _
        // Predicated region
        $region45: #{_bert_output_call.1} parent=35 // pred_check
          %p251 = pneg %p93
        $region46: #{_bert_output_call.1} parent=35 // pred_check_branch
          %253 = sbr.rel (%p251) target = $region48
        $region47: #{_bert_output_call.1} parent=35 // pred_region
          %255 = dma.done [#allocation6], 4096
        $region48: #{_bert_output_call.1} parent=35 // pred_fallthru
          _
        // Predicated region
        $region49: #{_bert_output_call.1} parent=35 // pred_check
          %p256 = pneg %p114
        $region50: #{_bert_output_call.1} parent=35 // pred_check_branch
          %258 = sbr.rel (%p256) target = $region52
        $region51: #{_bert_output_call.1} parent=35 // pred_region
          %260 = dma.done [#allocation9], 64
        $region52: #{_bert_output_call.1} parent=35 // pred_fallthru
          _
        %s261 = sand.u32 %s33, 1
        %s262 = scalar_lea.sflag [#allocation3], %s261
        %s263 = sand.u32 %s33, 1
        %s264 = smul.addr %s263, 16
        %s265 = scalar_lea.vmem [#allocation2], %s264
        %p266 = pneg %p46
        %p267 = pneg %p43
        %s268 = sand.u32 %s25, 1
        %s269 = scalar_lea.sflag [#allocation6], %s268
        %s270 = sand.u32 %s59, 1
        %s271 = smul.addr %s270, 8
        %s272 = scalar_lea.vmem [#allocation5], %s271
        %p273 = pneg %p72
        %p274 = pneg %p69
        %p275 = pneg %p93
        %p276 = pneg %p90
        %p277 = pneg %p114
        %p278 = pneg %p111
        %p279 = pneg %p140
        %p280 = pneg %p137
        %s281 = sand.u32 %s127, 1
        %s282 = scalar_lea.sflag [#allocation4], %s281
        %s283 = sand.u32 %s127, 1
        %s284 = smul.addr %s283, 8
        %s285 = scalar_lea.vmem [#allocation10], %s284
        %v286 = vld [vmem:[%s235] sm:$0xff]
        %v287 = vld [vmem:[%s235 + $0x8] sm:$0xff]
        %v288 = vld [vmem:[#allocation7] sm:$0xff]
        %v289 = vld [vmem:[#allocation7 + $0x8] sm:$0xff]
        %v290 = vld [vmem:[#allocation7 + $0x10] sm:$0xff]
        %v291 = vld [vmem:[#allocation7 + $0x18] sm:$0xff]
        %v292 = vld [vmem:[#allocation7 + $0x20] sm:$0xff]
        %v293 = vld [vmem:[#allocation7 + $0x28] sm:$0xff]
        %v294 = vld [vmem:[#allocation7 + $0x30] sm:$0xff]
        %v295 = vld [vmem:[#allocation7 + $0x38] sm:$0xff]
        %v296 = vld [vmem:[#allocation7 + $0x40] sm:$0xff]
        %v297 = vld [vmem:[#allocation7 + $0x48] sm:$0xff]
        %v298 = vld [vmem:[#allocation7 + $0x50] sm:$0xff]
        %v299 = vld [vmem:[#allocation7 + $0x58] sm:$0xff]
        %v300 = vld [vmem:[#allocation7 + $0x60] sm:$0xff]
        %v301 = vld [vmem:[#allocation7 + $0x68] sm:$0xff]
        %v302 = vld [vmem:[#allocation7 + $0x70] sm:$0xff]
        %v303 = vld [vmem:[#allocation7 + $0x78] sm:$0xff]
        %v304 = vld [vmem:[#allocation7 + $0x80] sm:$0xff]
        %v305 = vld [vmem:[#allocation7 + $0x88] sm:$0xff]
        %v306 = vld [vmem:[#allocation7 + $0x90] sm:$0xff]
        %v307 = vld [vmem:[#allocation7 + $0x98] sm:$0xff]
        %v308 = vld [vmem:[#allocation7 + $0xa0] sm:$0xff]
        %v309 = vld [vmem:[#allocation7 + $0xa8] sm:$0xff]
        %v310 = vld [vmem:[#allocation7 + $0xb0] sm:$0xff]
        %v311 = vld [vmem:[#allocation7 + $0xb8] sm:$0xff]
        %v312 = vld [vmem:[#allocation7 + $0xc0] sm:$0xff]
        %v313 = vld [vmem:[#allocation7 + $0xc8] sm:$0xff]
        %v314 = vld [vmem:[#allocation7 + $0xd0] sm:$0xff]
        %v315 = vld [vmem:[#allocation7 + $0xd8] sm:$0xff]
        %v316 = vld [vmem:[#allocation7 + $0xe0] sm:$0xff]
        %v317 = vld [vmem:[#allocation7 + $0xe8] sm:$0xff]
        %v318 = vld [vmem:[#allocation7 + $0xf0] sm:$0xff]
        %v319 = vld [vmem:[#allocation7 + $0xf8] sm:$0xff]
        %v320 = vld [vmem:[#allocation8] sm:$0x1]
        %v321 = vld [vmem:[#allocation8 + $0x1] sm:$0x1]
        %v322 = vld [vmem:[#allocation8 + $0x2] sm:$0x1]
        %v323 = vperm.slane %v320, 0
        %324 = vmatpush.msra.mxu0 %v303
        %325 = vmatpush.msra.mxu0 %v302
        %326 = vmatpush.msra.mxu0 %v301
        %327 = vmatpush.msra.mxu0 %v300
        %328 = vmatpush.msra.mxu0 %v299
        %329 = vmatpush.msra.mxu0 %v298
        %330 = vmatpush.msra.mxu0 %v297
        %331 = vmatpush.msra.mxu0 %v296
        %332 = vmatpush.msra.mxu0 %v295
        %333 = vmatpush.msra.mxu0 %v294
        %334 = vmatpush.msra.mxu0 %v293
        %335 = vmatpush.msra.mxu0 %v292
        %336 = vmatpush.msra.mxu0 %v291
        %337 = vmatpush.msra.mxu0 %v290
        %338 = vmatpush.msra.mxu0 %v289
        %339 = vmatpush.msra.mxu0 %v288
        %340 = vmatmul.f32.gmra.mxu0 %v286
        %v341 = vpop.f32.mrf.mxu0
        %v342 = vadd.f32 %v323, %v341
        %343 = vdwg.mxu0
        %344 = vmatpush.msra.mxu0 %v319
        %345 = vmatpush.msra.mxu0 %v318
        %346 = vmatpush.msra.mxu0 %v317
        %347 = vmatpush.msra.mxu0 %v316
        %348 = vmatpush.msra.mxu0 %v315
        %349 = vmatpush.msra.mxu0 %v314
        %350 = vmatpush.msra.mxu0 %v313
        %351 = vmatpush.msra.mxu0 %v312
        %352 = vmatpush.msra.mxu0 %v311
        %353 = vmatpush.msra.mxu0 %v310
        %354 = vmatpush.msra.mxu0 %v309
        %355 = vmatpush.msra.mxu0 %v308
        %356 = vmatpush.msra.mxu0 %v307
        %357 = vmatpush.msra.mxu0 %v306
        %358 = vmatpush.msra.mxu0 %v305
        %359 = vmatpush.msra.mxu0 %v304
        %360 = vmatmul.f32.gmra.mxu0 %v287
        %v361 = vpop.f32.mrf.mxu0
        %v362 = vadd.f32 %v342, %v361
        %363 = vdwg.mxu0
        %v364 = vld [vmem:[%s245] sm:$0xff]
        %v365 = vadd.f32 %v362, %v364
        %366 = vadd.xlane.f32.xlu0 %v365
        %v367 = vpop.xlane.xlu0 %366
        %v368 = vrcp.pop 128.0
        %v369 = vmul.f32 128.0, %v368
        %v370 = vsub.f32 1.0, %v369
        %v371 = vmul.f32 %v368, %v370
        %v372 = vadd.f32 %v368, %v371
        %vm373 = vweird.f32 %v368
        %v374 = vsel %vm373, %v368, %v372
        %v375 = vmul.f32 %v367, %v374
        %v376 = vmul.f32 %v365, %v365
        %377 = vadd.xlane.f32.xlu0 %v376
        %v378 = vpop.xlane.xlu0 %377
        %v379 = vmul.f32 %v378, %v374
        %v380 = vmul.f32 %v375, %v375
        %v381 = vsub.f32 %v379, %v380
        %v382 = vmax.f32 %v381, 0.0
        %v383 = vsub.f32 %v365, %v375
        %v384 = vadd.f32 %v382, 1e-05
        %v385 = vrsqrt.pop %v384
        %v386 = vmul.f32 %v385, %v384
        %v387 = vmul.f32 %v386, %v385
        %v388 = vmul.f32 0.5, %v387
        %v389 = vsub.f32 1.5, %v388
        %v390 = vmul.f32 %v385, %v389
        %vm391 = vweird.f32 %v384
        %vm392 = vweird.f32 %v385
        %vm393 = vmor %vm391, %vm392
        %v394 = vsel %vm393, %v385, %v390
        %v395 = vmul.f32 %v383, %v394
        %v396 = vperm.slane %v321, 0
        %v397 = vmul.f32 %v395, %v396
        %v398 = vperm.slane %v322, 0
        %v399 = vadd.f32 %v397, %v398
        %400 = vst [vmem:[%s285] sm:$0xff] %v399
        %s401 = sand.u32 %s127, 1
        %s402 = scalar_lea.sflag [#allocation4], %s401
        %s403 = sand.u32 %s127, 1
        %s404 = smul.addr %s403, 8
        %s405 = scalar_lea.vmem [#allocation10], %s404
        // Predicated region
        $region53: #{_bert_output_call.1} parent=35 // pred_check
          %p406 = pneg %p137
        $region54: #{_bert_output_call.1} parent=35 // pred_check_branch
          %408 = sbr.rel (%p406) target = $region56
        $region55: #{_bert_output_call.1} parent=35 // pred_region
          %410 = vsyncadd %s402, 0
          %s411 = smul.addr %s25, 8
          %s412 = scalar_lea.hbm %s4, %s411
          %s414 = sshll.u32 %s405, 4
          %s415 = int_to_ptr.vmem [resolvable:$true] %s414
          %s416 = sshll.u32 %s412, 4
          %s417 = int_to_ptr.hbm [resolvable:$true] %s416
          %419 = dma.vmem_to_hbm [thread:$0]  %s415, 128, %s417, %s402
        $region56: #{_bert_output_call.1} parent=35 // pred_fallthru
          _
      $region36: #{_bert_output_call.1} parent=5 // pred_fallthru
        _
      %p420 = scmp.le.s32.totalorder 2, %s20
      // Predicated region
      $region57: #{_bert_output_call.1} parent=5 // pred_check
        %p421 = pneg %p420
      $region58: #{_bert_output_call.1} parent=5 // pred_check_branch
        %423 = sbr.rel (%p421) target = $region60
      $region59: #{_bert_output_call.1} parent=5 // pred_region
        %s424 = ssub.s32 %s20, 2
        // Predicated region
        $region61: #{_bert_output_call.1} parent=59 // pred_check
          %p425 = pneg %p143
        $region62: #{_bert_output_call.1} parent=59 // pred_check_branch
          %427 = sbr.rel (%p425) target = $region64
        $region63: #{_bert_output_call.1} parent=59 // pred_region
          %s428 = sand.u32 %s128, 1
          %s429 = scalar_lea.sflag [#allocation4], %s428
          %s430 = sand.u32 %s128, 1
          %s431 = smul.addr %s430, 8
          %s432 = scalar_lea.vmem [#allocation10], %s431
          %434 = dma.done %s429, 128
        $region64: #{_bert_output_call.1} parent=59 // pred_fallthru
          _
      $region60: #{_bert_output_call.1} parent=5 // pred_fallthru
        _
    $region6: #{_bert_output_call.1} parent=1 // loop_footer
      %s24 = sadd.s32 1, %s20
    $region7: #{_bert_output_call.1} parent=1 // loop_footer_branch
      %19 = sbr.rel target = $region3
    $region8: #{_bert_output_call.1} parent=1 // loop_exit
      _
    %435 = vsyncpa [#allocation3], 1
    %s436 = scalar_lea.sflag [#allocation3], 1
    %437 = vsyncpa %s436, 1
    %438 = vsyncpa [#allocation6], 1
    %s439 = scalar_lea.sflag [#allocation6], 1
    %440 = vsyncpa %s439, 1
    %441 = vsyncpa [#allocation9], 1
    %442 = vsyncpa [#allocation4], 1
    %s443 = scalar_lea.sflag [#allocation4], 1
    %444 = vsyncpa %s443, 1

// kernel: _bert_output_call.1
$region0: #{_bert_output_call.1}
  #allocation0 [shape = 'u32[]', space=smem, size = 0x4, offset = 0x4, fixed_abs, tag = 'smem constant byte address 0x4 - core index']
  #allocation1 [shape = 'u32[72,128]{1,0:T(1,128)}', space=vmem, size = 0x9000, scoped, tag = 'internal scratch']
  %s0 = inlined_call_operand.hbm [shape: f32[16,256], index: 0, kind: input, shape index: {}]
  %s1 = inlined_call_operand.hbm [shape: f32[16,128], index: 1, kind: input, shape index: {}]
  %s2 = inlined_call_operand.hbm [shape: f32[256,128], index: 2, kind: input, shape index: {}]
  %s3 = inlined_call_operand.hbm [shape: f32[3,128], index: 3, kind: input, shape index: {}]
  %s4 = inlined_call_operand.hbm [shape: f32[16,128], index: 4, kind: output, shape index: {}]
  %s5 = sld [smem:[#allocation0]]
  $region65: #{_bert_output_call.1} parent=0
    _
  %s7 = ssub.s32 1, %s5
  %s8 = scalar_select 0, %s7, %s5
  $region1: #{_bert_output_call.1} parent=0
    #allocation2 [shape = 'u8[16384]{0}', space=vmem, size = 0x4000, scoped, tag = 'input window, operand 0']
    #allocation3 [shape = 's32[2]{0}', space=sflag, size = 0x8, scoped, tag = 'scoped memory for _bert_output_call.1']
    #allocation4 [shape = 's32[2]{0}', space=sflag, size = 0x8, scoped, tag = 'scoped memory for _bert_output_call.1']
    #allocation5 [shape = 'u8[8192]{0}', space=vmem, size = 0x2000, scoped, tag = 'input window, operand 1']
    #allocation6 [shape = 's32[2]{0}', space=sflag, size = 0x8, scoped, tag = 'scoped memory for _bert_output_call.1']
    #allocation7 [shape = 'u8[131072]{0}', space=vmem, size = 0x20000, scoped, tag = 'input window, operand 2, single buffered']
    #allocation8 [shape = 'u8[2048]{0}', space=vmem, size = 0x800, scoped, tag = 'input window, operand 3, single buffered']
    #allocation9 [shape = 's32[1]{0}', space=sflag, size = 0x4, scoped, tag = 'scoped memory for _bert_output_call.1']
    #allocation10 [shape = 'u8[8192]{0}', space=vmem, size = 0x2000, scoped, tag = 'output window, operand 0']
    %9 = vsyncpa [#allocation3], 0
    %s10 = scalar_lea.sflag [#allocation3], 1
    %11 = vsyncpa %s10, 0
    %12 = vsyncpa [#allocation6], 0
    %s13 = scalar_lea.sflag [#allocation6], 1
    %14 = vsyncpa %s13, 0
    %15 = vsyncpa [#allocation9], 0
    %16 = vsyncpa [#allocation4], 0
    %s17 = scalar_lea.sflag [#allocation4], 1
    %18 = vsyncpa %s17, 0
    loop: start=0, step=1, limit=4
    $region2: #{_bert_output_call.1} parent=1 // loop_pre_header
      _
    $region3: #{_bert_output_call.1} parent=1 // loop_header
      %s20 = sphi 0, %s24
      %p21 = scmp.ge.s32.totalorder %s20, 4
      %s30 = sphi 0, %s32
      %s33 = sphi 0, %s30
      %s34 = sphi 0, %s33
      %s50 = sphi 0, %s34
      %s56 = sphi 0, %s58
      %s59 = sphi 0, %s56
      %s60 = sphi 0, %s59
      %s76 = sphi 0, %s60
      %s80 = sphi 0, %s80
      %s82 = sphi 0, %s80
      %s83 = sphi 0, %s82
      %s97 = sphi 0, %s83
      %s101 = sphi 0, %s101
      %s103 = sphi 0, %s101
      %s104 = sphi 0, %s103
      %s118 = sphi 0, %s104
      %s124 = sphi 0, %s126
      %s127 = sphi 0, %s124
      %s128 = sphi 0, %s127
      %s144 = sphi 0, %s128
    $region4: #{_bert_output_call.1} parent=1 // loop_header_branch
      %23 = sbr.rel (%p21) target = $region8
    $region5: #{_bert_output_call.1} parent=1 // loop_body
      %s25 = ssub.s32 %s20, 1
      %s26 = ssub.s32 %s20, 2
      %s27 = sadd.s32 %s20, 1
      %s28 = ssub.s32 %s20, %s27
      %p29 = scmp.eq.s32.totalorder %s28, 0
      %s31 = sadd.s32 %s30, 1
      %s32 = scalar_select %p29, %s30, %s31
      %p35 = pneg %p29
      %p36 = scmp.eq.s32.totalorder %s20, 1
      %p37 = por %p35, %p36
      %p38 = scmp.ne.s32.totalorder %s30, %s33
      %p39 = scmp.eq.s32.totalorder %s20, 0
      %p40 = por %p38, %p39
      %p41 = scmp.ne.s32.totalorder %s30, %s33
      %p42 = scmp.eq.s32.totalorder %s25, 1
      %p43 = por %p41, %p42
      %p44 = scmp.ne.s32.totalorder %s33, %s34
      %p45 = scmp.eq.s32.totalorder %s25, 0
      %p46 = por %p44, %p45
      %p47 = scmp.ne.s32.totalorder %s33, %s34
      %p48 = scmp.eq.s32.totalorder %s26, 1
      %p49 = por %p47, %p48
      %p51 = scmp.ne.s32.totalorder %s34, %s50
      %p52 = scmp.eq.s32.totalorder %s26, 0
      %p53 = por %p51, %p52
      %s54 = ssub.s32 %s20, %s27
      %p55 = scmp.eq.s32.totalorder %s54, 0
      %s57 = sadd.s32 %s56, 1
      %s58 = scalar_select %p55, %s56, %s57
      %p61 = pneg %p55
      %p62 = scmp.eq.s32.totalorder %s20, 1
      %p63 = por %p61, %p62
      %p64 = scmp.ne.s32.totalorder %s56, %s59
      %p65 = scmp.eq.s32.totalorder %s20, 0
      %p66 = por %p64, %p65
      %p67 = scmp.ne.s32.totalorder %s56, %s59
      %p68 = scmp.eq.s32.totalorder %s25, 1
      %p69 = por %p67, %p68
      %p70 = scmp.ne.s32.totalorder %s59, %s60
      %p71 = scmp.eq.s32.totalorder %s25, 0
      %p72 = por %p70, %p71
      %p73 = scmp.ne.s32.totalorder %s59, %s60
      %p74 = scmp.eq.s32.totalorder %s26, 1
      %p75 = por %p73, %p74
      %p77 = scmp.ne.s32.totalorder %s60, %s76
      %p78 = scmp.eq.s32.totalorder %s26, 0
      %p79 = por %p77, %p78
      %s81 = sadd.s32 %s80, 1
      %p84 = scmp.eq.s32.totalorder %s20, 1
      %p85 = scmp.ne.s32.totalorder %s80, %s82
      %p86 = scmp.eq.s32.totalorder %s20, 0
      %p87 = por %p85, %p86
      %p88 = scmp.ne.s32.totalorder %s80, %s82
      %p89 = scmp.eq.s32.totalorder %s25, 1
      %p90 = por %p88, %p89
      %p91 = scmp.ne.s32.totalorder %s82, %s83
      %p92 = scmp.eq.s32.totalorder %s25, 0
      %p93 = por %p91, %p92
      %p94 = scmp.ne.s32.totalorder %s82, %s83
      %p95 = scmp.eq.s32.totalorder %s26, 1
      %p96 = por %p94, %p95
      %p98 = scmp.ne.s32.totalorder %s83, %s97
      %p99 = scmp.eq.s32.totalorder %s26, 0
      %p100 = por %p98, %p99
      %s102 = sadd.s32 %s101, 1
      %p105 = scmp.eq.s32.totalorder %s20, 1
      %p106 = scmp.ne.s32.totalorder %s101, %s103
      %p107 = scmp.eq.s32.totalorder %s20, 0
      %p108 = por %p106, %p107
      %p109 = scmp.ne.s32.totalorder %s101, %s103
      %p110 = scmp.eq.s32.totalorder %s25, 1
      %p111 = por %p109, %p110
      %p112 = scmp.ne.s32.totalorder %s103, %s104
      %p113 = scmp.eq.s32.totalorder %s25, 0
      %p114 = por %p112, %p113
      %p115 = scmp.ne.s32.totalorder %s103, %s104
      %p116 = scmp.eq.s32.totalorder %s26, 1
      %p117 = por %p115, %p116
      %p119 = scmp.ne.s32.totalorder %s104, %s118
      %p120 = scmp.eq.s32.totalorder %s26, 0
      %p121 = por %p119, %p120
      %s122 = ssub.s32 %s20, %s27
      %p123 = scmp.eq.s32.totalorder %s122, 0
      %s125 = sadd.s32 %s124, 1
      %s126 = scalar_select %p123, %s124, %s125
      %p129 = pneg %p123
      %p130 = scmp.eq.s32.totalorder %s20, 1
      %p131 = por %p129, %p130
      %p132 = scmp.ne.s32.totalorder %s124, %s127
      %p133 = scmp.eq.s32.totalorder %s20, 0
      %p134 = por %p132, %p133
      %p135 = scmp.ne.s32.totalorder %s124, %s127
      %p136 = scmp.eq.s32.totalorder %s25, 1
      %p137 = por %p135, %p136
      %p138 = scmp.ne.s32.totalorder %s127, %s128
      %p139 = scmp.eq.s32.totalorder %s25, 0
      %p140 = por %p138, %p139
      %p141 = scmp.ne.s32.totalorder %s127, %s128
      %p142 = scmp.eq.s32.totalorder %s26, 1
      %p143 = por %p141, %p142
      %p145 = scmp.ne.s32.totalorder %s128, %s144
      %p146 = scmp.eq.s32.totalorder %s26, 0
      %p147 = por %p145, %p146
      %p148 = scmp.le.s32.totalorder 1, %s20
      %p149 = scmp.lt.s32.totalorder %s20, 3
      %p150 = pnand %p148, %p149
      %p151 = pneg %p150
      // Predicated region
      $region9: #{_bert_output_call.1} parent=5 // pred_check
        _
      $region10: #{_bert_output_call.1} parent=5 // pred_check_branch
        %153 = sbr.rel (%p150) target = $region12
      $region11: #{_bert_output_call.1} parent=5 // pred_region
        %s154 = ssub.s32 %s20, 1
        // Predicated region
        $region13: #{_bert_output_call.1} parent=11 // pred_check
          %p155 = pneg %p93
        $region14: #{_bert_output_call.1} parent=11 // pred_check_branch
          %157 = sbr.rel (%p155) target = $region16
        $region15: #{_bert_output_call.1} parent=11 // pred_region
          %159 = vsyncadd [#allocation6], 0
          %s160 = sshll.u32 %s2, 4
          %s161 = int_to_ptr.hbm [resolvable:$true] %s160
          %s162 = sshll.u32 [#allocation7], 4
          %s163 = int_to_ptr.vmem [resolvable:$true] %s162
          %168 = dma.hbm_to_vmem [thread:$0]  %s161, 4096, %s163, [#allocation6], 128, 128, 8
        $region16: #{_bert_output_call.1} parent=11 // pred_fallthru
          _
        // Predicated region
        $region17: #{_bert_output_call.1} parent=11 // pred_check
          %p169 = pneg %p114
        $region18: #{_bert_output_call.1} parent=11 // pred_check_branch
          %171 = sbr.rel (%p169) target = $region20
        $region19: #{_bert_output_call.1} parent=11 // pred_region
          %173 = vsyncadd [#allocation9], 0
          %s175 = sshll.u32 %s3, 4
          %s176 = int_to_ptr.hbm [resolvable:$true] %s175
          %s177 = sshll.u32 [#allocation8], 4
          %s178 = int_to_ptr.vmem [resolvable:$true] %s177
          %180 = dma.hbm_to_vmem [thread:$0]  %s176, 64, %s178, [#allocation9]
        $region20: #{_bert_output_call.1} parent=11 // pred_fallthru
          _
      $region12: #{_bert_output_call.1} parent=5 // pred_fallthru
        _
      %p181 = scmp.lt.s32.totalorder %s20, 2
      // Predicated region
      $region21: #{_bert_output_call.1} parent=5 // pred_check
        %p182 = pneg %p181
      $region22: #{_bert_output_call.1} parent=5 // pred_check_branch
        %184 = sbr.rel (%p182) target = $region24
      $region23: #{_bert_output_call.1} parent=5 // pred_region
        // Predicated region
        $region25: #{_bert_output_call.1} parent=23 // pred_check
          %p185 = pneg %p40
        $region26: #{_bert_output_call.1} parent=23 // pred_check_branch
          %187 = sbr.rel (%p185) target = $region28
        $region27: #{_bert_output_call.1} parent=23 // pred_region
          %s188 = sand.u32 %s30, 1
          %s189 = scalar_lea.sflag [#allocation3], %s188
          %s190 = sand.u32 %s30, 1
          %s191 = smul.addr %s190, 16
          %s192 = scalar_lea.vmem [#allocation2], %s191
          %194 = vsyncadd %s189, 0
          %s195 = smul.addr %s20, 2
          %s196 = smul.addr %s195, 8
          %s197 = scalar_lea.hbm %s0, %s196
          %s199 = sshll.u32 %s197, 4
          %s200 = int_to_ptr.hbm [resolvable:$true] %s199
          %s201 = sshll.u32 %s192, 4
          %s202 = int_to_ptr.vmem [resolvable:$true] %s201
          %204 = dma.hbm_to_vmem [thread:$0]  %s200, 256, %s202, %s189
        $region28: #{_bert_output_call.1} parent=23 // pred_fallthru
          _
        // Predicated region
        $region29: #{_bert_output_call.1} parent=23 // pred_check
          %p205 = pneg %p66
        $region30: #{_bert_output_call.1} parent=23 // pred_check_branch
          %207 = sbr.rel (%p205) target = $region32
        $region31: #{_bert_output_call.1} parent=23 // pred_region
          %s208 = sand.u32 %s20, 1
          %s209 = scalar_lea.sflag [#allocation6], %s208
          %s210 = sand.u32 %s56, 1
          %s211 = smul.addr %s210, 8
          %s212 = scalar_lea.vmem [#allocation5], %s211
          %214 = vsyncadd %s209, 0
          %s215 = smul.addr %s20, 8
          %s216 = scalar_lea.hbm %s1, %s215
          %s218 = sshll.u32 %s216, 4
          %s219 = int_to_ptr.hbm [resolvable:$true] %s218
          %s220 = sshll.u32 %s212, 4
          %s221 = int_to_ptr.vmem [resolvable:$true] %s220
          %223 = dma.hbm_to_vmem [thread:$0]  %s219, 128, %s221, %s209
        $region32: #{_bert_output_call.1} parent=23 // pred_fallthru
          _
      $region24: #{_bert_output_call.1} parent=5 // pred_fallthru
        _
      %p224 = scmp.le.s32.totalorder 1, %s20
      %p225 = scmp.lt.s32.totalorder %s20, 3
      %p226 = pnand %p224, %p225
      %p227 = pneg %p226
      // Predicated region
      $region33: #{_bert_output_call.1} parent=5 // pred_check
        _
      $region34: #{_bert_output_call.1} parent=5 // pred_check_branch
        %229 = sbr.rel (%p226) target = $region36
      $region35: #{_bert_output_call.1} parent=5 // pred_region
        %s230 = ssub.s32 %s20, 1
        %s231 = sand.u32 %s33, 1
        %s232 = scalar_lea.sflag [#allocation3], %s231
        %s233 = sand.u32 %s33, 1
        %s234 = smul.addr %s233, 16
        %s235 = scalar_lea.vmem [#allocation2], %s234
        // Predicated region
        $region37: #{_bert_output_call.1} parent=35 // pred_check
          %p236 = pneg %p46
        $region38: #{_bert_output_call.1} parent=35 // pred_check_branch
          %238 = sbr.rel (%p236) target = $region40
        $region39: #{_bert_output_call.1} parent=35 // pred_region
          %240 = dma.done %s232, 256
        $region40: #{_bert_output_call.1} parent=35 // pred_fallthru
          _
        %s241 = sand.u32 %s25, 1
        %s242 = scalar_lea.sflag [#allocation6], %s241
        %s243 = sand.u32 %s59, 1
        %s244 = smul.addr %s243, 8
        %s245 = scalar_lea.vmem [#allocation5], %s244
        // Predicated region
        $region41: #{_bert_output_call.1} parent=35 // pred_check
          %p246 = pneg %p72
        $region42: #{_bert_output_call.1} parent=35 // pred_check_branch
          %248 = sbr.rel (%p246) target = $region44
        $region43: #{_bert_output_call.1} parent=35 // pred_region
          %250 = dma.done %s242, 128
        $region44: #{_bert_output_call.1} parent=35 // pred_fallthru
          _
        // Predicated region
        $region45: #{_bert_output_call.1} parent=35 // pred_check
          %p251 = pneg %p93
        $region46: #{_bert_output_call.1} parent=35 // pred_check_branch
          %253 = sbr.rel (%p251) target = $region48
        $region47: #{_bert_output_call.1} parent=35 // pred_region
          %255 = dma.done [#allocation6], 4096
        $region48: #{_bert_output_call.1} parent=35 // pred_fallthru
          _
        // Predicated region
        $region49: #{_bert_output_call.1} parent=35 // pred_check
          %p256 = pneg %p114
        $region50: #{_bert_output_call.1} parent=35 // pred_check_branch
          %258 = sbr.rel (%p256) target = $region52
        $region51: #{_bert_output_call.1} parent=35 // pred_region
          %260 = dma.done [#allocation9], 64
        $region52: #{_bert_output_call.1} parent=35 // pred_fallthru
          _
        %s261 = sand.u32 %s33, 1
        %s262 = scalar_lea.sflag [#allocation3], %s261
        %s263 = sand.u32 %s33, 1
        %s264 = smul.addr %s263, 16
        %s265 = scalar_lea.vmem [#allocation2], %s264
        %p266 = pneg %p46
        %p267 = pneg %p43
        %s268 = sand.u32 %s25, 1
        %s269 = scalar_lea.sflag [#allocation6], %s268
        %s270 = sand.u32 %s59, 1
        %s271 = smul.addr %s270, 8
        %s272 = scalar_lea.vmem [#allocation5], %s271
        %p273 = pneg %p72
        %p274 = pneg %p69
        %p275 = pneg %p93
        %p276 = pneg %p90
        %p277 = pneg %p114
        %p278 = pneg %p111
        %p279 = pneg %p140
        %p280 = pneg %p137
        %s281 = sand.u32 %s127, 1
        %s282 = scalar_lea.sflag [#allocation4], %s281
        %s283 = sand.u32 %s127, 1
        %s284 = smul.addr %s283, 8
        %s285 = scalar_lea.vmem [#allocation10], %s284
        %v286 = vld [vmem:[%s235] sm:$0xff]
        %v287 = vld [vmem:[%s235 + $0x8] sm:$0xff]
        %v288 = vld [vmem:[#allocation7] sm:$0xff]
        %v289 = vld [vmem:[#allocation7 + $0x8] sm:$0xff]
        %v290 = vld [vmem:[#allocation7 + $0x10] sm:$0xff]
        %v291 = vld [vmem:[#allocation7 + $0x18] sm:$0xff]
        %v292 = vld [vmem:[#allocation7 + $0x20] sm:$0xff]
        %v293 = vld [vmem:[#allocation7 + $0x28] sm:$0xff]
        %v294 = vld [vmem:[#allocation7 + $0x30] sm:$0xff]
        %v295 = vld [vmem:[#allocation7 + $0x38] sm:$0xff]
        %v296 = vld [vmem:[#allocation7 + $0x40] sm:$0xff]
        %v297 = vld [vmem:[#allocation7 + $0x48] sm:$0xff]
        %v298 = vld [vmem:[#allocation7 + $0x50] sm:$0xff]
        %v299 = vld [vmem:[#allocation7 + $0x58] sm:$0xff]
        %v300 = vld [vmem:[#allocation7 + $0x60] sm:$0xff]
        %v301 = vld [vmem:[#allocation7 + $0x68] sm:$0xff]
        %v302 = vld [vmem:[#allocation7 + $0x70] sm:$0xff]
        %v303 = vld [vmem:[#allocation7 + $0x78] sm:$0xff]
        %v304 = vld [vmem:[#allocation7 + $0x80] sm:$0xff]
        %v305 = vld [vmem:[#allocation7 + $0x88] sm:$0xff]
        %v306 = vld [vmem:[#allocation7 + $0x90] sm:$0xff]
        %v307 = vld [vmem:[#allocation7 + $0x98] sm:$0xff]
        %v308 = vld [vmem:[#allocation7 + $0xa0] sm:$0xff]
        %v309 = vld [vmem:[#allocation7 + $0xa8] sm:$0xff]
        %v310 = vld [vmem:[#allocation7 + $0xb0] sm:$0xff]
        %v311 = vld [vmem:[#allocation7 + $0xb8] sm:$0xff]
        %v312 = vld [vmem:[#allocation7 + $0xc0] sm:$0xff]
        %v313 = vld [vmem:[#allocation7 + $0xc8] sm:$0xff]
        %v314 = vld [vmem:[#allocation7 + $0xd0] sm:$0xff]
        %v315 = vld [vmem:[#allocation7 + $0xd8] sm:$0xff]
        %v316 = vld [vmem:[#allocation7 + $0xe0] sm:$0xff]
        %v317 = vld [vmem:[#allocation7 + $0xe8] sm:$0xff]
        %v318 = vld [vmem:[#allocation7 + $0xf0] sm:$0xff]
        %v319 = vld [vmem:[#allocation7 + $0xf8] sm:$0xff]
        %v320 = vld [vmem:[#allocation8] sm:$0x1]
        %v321 = vld [vmem:[#allocation8 + $0x1] sm:$0x1]
        %v322 = vld [vmem:[#allocation8 + $0x2] sm:$0x1]
        %v323 = vperm.slane %v320, 0
        %324 = vmatpush.msra.mxu0 %v303
        %325 = vmatpush.msra.mxu0 %v302
        %326 = vmatpush.msra.mxu0 %v301
        %327 = vmatpush.msra.mxu0 %v300
        %328 = vmatpush.msra.mxu0 %v299
        %329 = vmatpush.msra.mxu0 %v298
        %330 = vmatpush.msra.mxu0 %v297
        %331 = vmatpush.msra.mxu0 %v296
        %332 = vmatpush.msra.mxu0 %v295
        %333 = vmatpush.msra.mxu0 %v294
        %334 = vmatpush.msra.mxu0 %v293
        %335 = vmatpush.msra.mxu0 %v292
        %336 = vmatpush.msra.mxu0 %v291
        %337 = vmatpush.msra.mxu0 %v290
        %338 = vmatpush.msra.mxu0 %v289
        %339 = vmatpush.msra.mxu0 %v288
        %340 = vmatmul.f32.gmra.mxu0 %v286
        %v341 = vpop.f32.mrf.mxu0
        %v342 = vadd.f32 %v323, %v341
        %343 = vdwg.mxu0
        %344 = vmatpush.msra.mxu0 %v319
        %345 = vmatpush.msra.mxu0 %v318
        %346 = vmatpush.msra.mxu0 %v317
        %347 = vmatpush.msra.mxu0 %v316
        %348 = vmatpush.msra.mxu0 %v315
        %349 = vmatpush.msra.mxu0 %v314
        %350 = vmatpush.msra.mxu0 %v313
        %351 = vmatpush.msra.mxu0 %v312
        %352 = vmatpush.msra.mxu0 %v311
        %353 = vmatpush.msra.mxu0 %v310
        %354 = vmatpush.msra.mxu0 %v309
        %355 = vmatpush.msra.mxu0 %v308
        %356 = vmatpush.msra.mxu0 %v307
        %357 = vmatpush.msra.mxu0 %v306
        %358 = vmatpush.msra.mxu0 %v305
        %359 = vmatpush.msra.mxu0 %v304
        %360 = vmatmul.f32.gmra.mxu0 %v287
        %v361 = vpop.f32.mrf.mxu0
        %v362 = vadd.f32 %v342, %v361
        %363 = vdwg.mxu0
        %v364 = vld [vmem:[%s245] sm:$0xff]
        %v365 = vadd.f32 %v362, %v364
        %366 = vadd.xlane.f32.xlu0 %v365
        %v367 = vpop.xlane.xlu0 %366
        %v368 = vrcp.pop 128.0
        %v369 = vmul.f32 128.0, %v368
        %v370 = vsub.f32 1.0, %v369
        %v371 = vmul.f32 %v368, %v370
        %v372 = vadd.f32 %v368, %v371
        %vm373 = vweird.f32 %v368
        %v374 = vsel %vm373, %v368, %v372
        %v375 = vmul.f32 %v367, %v374
        %v376 = vmul.f32 %v365, %v365
        %377 = vadd.xlane.f32.xlu0 %v376
        %v378 = vpop.xlane.xlu0 %377
        %v379 = vmul.f32 %v378, %v374
        %v380 = vmul.f32 %v375, %v375
        %v381 = vsub.f32 %v379, %v380
        %v382 = vmax.f32 %v381, 0.0
        %v383 = vsub.f32 %v365, %v375
        %v384 = vadd.f32 %v382, 1e-05
        %v385 = vrsqrt.pop %v384
        %v386 = vmul.f32 %v385, %v384
        %v387 = vmul.f32 %v386, %v385
        %v388 = vmul.f32 0.5, %v387
        %v389 = vsub.f32 1.5, %v388
        %v390 = vmul.f32 %v385, %v389
        %vm391 = vweird.f32 %v384
        %vm392 = vweird.f32 %v385
        %vm393 = vmor %vm391, %vm392
        %v394 = vsel %vm393, %v385, %v390
        %v395 = vmul.f32 %v383, %v394
        %v396 = vperm.slane %v321, 0
        %v397 = vmul.f32 %v395, %v396
        %v398 = vperm.slane %v322, 0
        %v399 = vadd.f32 %v397, %v398
        %400 = vst [vmem:[%s285] sm:$0xff] %v399
        %s401 = sand.u32 %s127, 1
        %s402 = scalar_lea.sflag [#allocation4], %s401
        %s403 = sand.u32 %s127, 1
        %s404 = smul.addr %s403, 8
        %s405 = scalar_lea.vmem [#allocation10], %s404
        // Predicated region
        $region53: #{_bert_output_call.1} parent=35 // pred_check
          %p406 = pneg %p137
        $region54: #{_bert_output_call.1} parent=35 // pred_check_branch
          %408 = sbr.rel (%p406) target = $region56
        $region55: #{_bert_output_call.1} parent=35 // pred_region
          %410 = vsyncadd %s402, 0
          %s411 = smul.addr %s25, 8
          %s412 = scalar_lea.hbm %s4, %s411
          %s414 = sshll.u32 %s405, 4
          %s415 = int_to_ptr.vmem [resolvable:$true] %s414
          %s416 = sshll.u32 %s412, 4
          %s417 = int_to_ptr.hbm [resolvable:$true] %s416
          %419 = dma.vmem_to_hbm [thread:$0]  %s415, 128, %s417, %s402
        $region56: #{_bert_output_call.1} parent=35 // pred_fallthru
          _
      $region36: #{_bert_output_call.1} parent=5 // pred_fallthru
        _
      %p420 = scmp.le.s32.totalorder 2, %s20
      // Predicated region
      $region57: #{_bert_output_call.1} parent=5 // pred_check
        %p421 = pneg %p420
      $region58: #{_bert_output_call.1} parent=5 // pred_check_branch
        %423 = sbr.rel (%p421) target = $region60
      $region59: #{_bert_output_call.1} parent=5 // pred_region
        %s424 = ssub.s32 %s20, 2
        // Predicated region
        $region61: #{_bert_output_call.1} parent=59 // pred_check
          %p425 = pneg %p143
        $region62: #{_bert_output_call.1} parent=59 // pred_check_branch
          %427 = sbr.rel (%p425) target = $region64
        $region63: #{_bert_output_call.1} parent=59 // pred_region
          %s428 = sand.u32 %s128, 1
          %s429 = scalar_lea.sflag [#allocation4], %s428
          %s430 = sand.u32 %s128, 1
          %s431 = smul.addr %s430, 8
          %s432 = scalar_lea.vmem [#allocation10], %s431
          %434 = dma.done %s429, 128
        $region64: #{_bert_output_call.1} parent=59 // pred_fallthru
          _
      $region60: #{_bert_output_call.1} parent=5 // pred_fallthru
        _
    $region6: #{_bert_output_call.1} parent=1 // loop_footer
      %s24 = sadd.s32 1, %s20
    $region7: #{_bert_output_call.1} parent=1 // loop_footer_branch
      %19 = sbr.rel target = $region3
    $region8: #{_bert_output_call.1} parent=1 // loop_exit
      _
    %435 = vsyncpa [#allocation3], 1
    %s436 = scalar_lea.sflag [#allocation3], 1
    %437 = vsyncpa %s436, 1
    %438 = vsyncpa [#allocation6], 1
    %s439 = scalar_lea.sflag [#allocation6], 1
    %440 = vsyncpa %s439, 1
    %441 = vsyncpa [#allocation9], 1
    %442 = vsyncpa [#allocation4], 1
    %s443 = scalar_lea.sflag [#allocation4], 1
    %444 = vsyncpa %s443, 1

</llo_original>
